<compile_context>
chip_gen: v7x
topology: tpu7x:2x2x1
jax: 0.10.0
libtpu: 0.0.40
codegen_flags: <defaults>
</compile_context>

<pallas_src>
import functools

import jax
import jax.numpy as jnp
from jax.experimental import pallas as pl
from jax.experimental.pallas import tpu as pltpu

AGREE = 2
DISAGREE = 1
HAS_STANCE = 0

BERT_HIDDEN = 768  # bert-base-uncased hidden_size
_LANE = 128
_SUBLANE = 8


def _round_up(x, m):
    return (x + m - 1) // m * m


# -----------------------------------------------------------------------------
# Pallas kernel
#   score[b, n] = gamma - || (pooled[b] @ W + bias) + rel[b] - ent[ids[b, n]] ||_1
# -----------------------------------------------------------------------------
def _transe_kernel(gamma_ref, ids_ref, pooled_ref, w_ref, relb_ref, ent_ref,
                   score_ref, dist_ref, *, s_pad, fresh):
    """dist_ref[:, s] caches  gamma - ||hr[b] - ent[s]||_1  for every symbolic
    entity s; per-negative work is then an s_pad-way select (exactly one s
    matches each id), finished with one dense (tb, tn) store."""

    def _compute_dist():
        # head-projection + relation (+ bias folded into relb outside).
        hr = (jnp.dot(pooled_ref[...], w_ref[...],
                      preferred_element_type=jnp.float32)
              + relb_ref[...])                                    # (tb, d_pad)
        gamma = gamma_ref[0, 0]
        for s in range(s_pad):                                    # static unroll
            l1 = jnp.sum(jnp.abs(hr - ent_ref[s:s + 1, :]),
                         axis=1, keepdims=True)                   # (tb, 1)
            dist_ref[:, s:s + 1] = gamma - l1

    if fresh:
        # Single batch tile, many N tiles: recompute per step so both grid
        # axes can be "parallel" (both v7x TensorCores get work).
        _compute_dist()
    else:
        # Compute once per batch tile, reuse across the inner N axis.
        pl.when(pl.program_id(1) == 0)(_compute_dist)

    ids = ids_ref[...]                                            # (tb, tn) int32
    score = jnp.where(ids == 0, dist_ref[:, 0:1], 0.0)
    for s in range(1, s_pad):                                     # static unroll
        score = score + jnp.where(ids == s, dist_ref[:, s:s + 1], 0.0)
    score_ref[...] = score                                        # one unmasked store


def transe_score(pooled, w, b, rel, entity_embedding, tail_ids, gamma):
    """pooled: (B, H) f32; w: (H, D); b: (D,); rel: (B, D);
    entity_embedding: (S, D); tail_ids: (B, N) int32; gamma: float.
    Returns scores (B, N) f32."""
    pooled = pooled.astype(jnp.float32)
    w = w.astype(jnp.float32)
    rel_b = rel.astype(jnp.float32) + b.astype(jnp.float32)[None, :]  # fold bias
    ent = entity_embedding.astype(jnp.float32)
    tail_ids = tail_ids.astype(jnp.int32)

    B, H = pooled.shape
    D = w.shape[1]
    S = ent.shape[0]
    N = tail_ids.shape[1]

    # TPU-friendly padded shapes (zero padding contributes nothing: padded D
    # columns are zero in W/relb/ent, padded ids/rows are sliced off below).
    h_pad = _round_up(H, _LANE)
    d_pad = _round_up(D, _LANE)
    s_pad = _round_up(S, _SUBLANE)
    if B <= _LANE:
        b_pad = _round_up(B, _SUBLANE)
        tb = b_pad
    else:
        b_pad = _round_up(B, _LANE)
        tb = _LANE
    n_pad = _round_up(N, _LANE)
    tn = 256 if n_pad % 256 == 0 else _LANE   # bigger N tiles amortize grid overhead

    pooled_p = jnp.pad(pooled, ((0, b_pad - B), (0, h_pad - H)))      # (B_pad, H_pad)
    w_p = jnp.pad(w, ((0, h_pad - H), (0, d_pad - D)))                # (H_pad, D_pad)
    relb_p = jnp.pad(rel_b, ((0, b_pad - B), (0, d_pad - D)))         # (B_pad, D_pad)
    ent_p = jnp.pad(ent, ((0, s_pad - S), (0, d_pad - D)))            # (S_pad, D_pad)
    ids_p = jnp.pad(tail_ids, ((0, b_pad - B), (0, n_pad - N)))       # (B_pad, N_pad)
    gamma_arr = jnp.full((1, 1), gamma, dtype=jnp.float32)

    grid = (b_pad // tb, n_pad // tn)
    fresh = (grid[0] == 1 and grid[1] > 1)
    dist_lanes = _round_up(s_pad, _LANE)

    # Explicit VMEM accounting (double-buffered pipelined tiles + scratch) so
    # the limit stays honest on v7x's 64 MiB.
    buf_bytes = 4 * (
        2 * tb * tn            # tail ids
        + 2 * tb * h_pad       # pooled
        + 2 * h_pad * d_pad    # W (constant block index, still budgeted x2)
        + 2 * tb * d_pad       # rel + bias
        + 2 * s_pad * d_pad    # entity table
        + 2 * tb * tn          # output
        + tb * dist_lanes)     # dist scratch
    vmem_limit = int(min(max(4 * buf_bytes, 16 * 1024 * 1024), 48 * 1024 * 1024))

    proj_dist_flops = 2 * tb * h_pad * d_pad + 4 * s_pad * tb * d_pad
    flops = (grid[0] * proj_dist_flops * (grid[1] if fresh else 1)
             + grid[0] * grid[1] * 2 * s_pad * tb * tn)
    bytes_accessed = 4 * (b_pad * h_pad + h_pad * d_pad + b_pad * d_pad
                          + s_pad * d_pad + 2 * b_pad * n_pad + 1)

    kernel = functools.partial(_transe_kernel, s_pad=s_pad, fresh=fresh)

    out = pl.pallas_call(
        kernel,
        out_shape=jax.ShapeDtypeStruct((b_pad, n_pad), jnp.float32),
        grid_spec=pltpu.PrefetchScalarGridSpec(
            num_scalar_prefetch=0,
            grid=grid,
            in_specs=[
                pl.BlockSpec(memory_space=pltpu.MemorySpace.SMEM),    # gamma scalar
                pl.BlockSpec((tb, tn), lambda i, j: (i, j)),          # tail ids
                pl.BlockSpec((tb, h_pad), lambda i, j: (i, 0)),       # pooled
                pl.BlockSpec((h_pad, d_pad), lambda i, j: (0, 0)),    # W (resident)
                pl.BlockSpec((tb, d_pad), lambda i, j: (i, 0)),       # rel + bias
                pl.BlockSpec((s_pad, d_pad), lambda i, j: (0, 0)),    # entity table (resident)
            ],
            out_specs=pl.BlockSpec((tb, tn), lambda i, j: (i, j)),
            scratch_shapes=[pltpu.VMEM((tb, dist_lanes), jnp.float32)],  # dist cache
        ),
        compiler_params=pltpu.CompilerParams(
            dimension_semantics=(("parallel", "parallel") if fresh
                                 else ("parallel", "arbitrary")),
            vmem_limit_bytes=vmem_limit),
        cost_estimate=pl.CostEstimate(
            flops=int(flops), transcendentals=0,
            bytes_accessed=int(bytes_accessed)),
    )(gamma_arr, ids_p, pooled_p, w_p, relb_p, ent_p)

    return out[:B, :N]


# -----------------------------------------------------------------------------
# Model wrapper (parameter setup + gather glue in plain JAX)
# -----------------------------------------------------------------------------
class KGEModelPallas:
    def __init__(self, model_name, nentity_raw, nentity_sym, nrelation,
                 hidden_dim, gamma, key):
        if model_name != 'TransE':
            raise ValueError('only TransE is implemented in this synthetic kernel')
        self.model_name = model_name
        self.nentity_raw = nentity_raw
        self.nentity_sym = nentity_sym
        self.nrelation = nrelation
        self.epsilon = 2.0
        self.gamma = float(gamma)
        self.embedding_range = (self.gamma + self.epsilon) / hidden_dim
        self.entity_dim = hidden_dim      # no double_entity_embedding for TransE
        self.relation_dim = hidden_dim

        k1, k2, k3, k4 = jax.random.split(key, 4)
        self.entity_embedding = jax.random.uniform(
            k1, (nentity_sym, self.entity_dim), jnp.float32,
            -self.embedding_range, self.embedding_range)
        self.relation_embedding = jax.random.uniform(
            k2, (nrelation, self.relation_dim), jnp.float32,
            -self.embedding_range, self.embedding_range)
        bound = 1.0 / (BERT_HIDDEN ** 0.5)
        self.bert2hidden_w = jax.random.uniform(
            k3, (BERT_HIDDEN, self.entity_dim), jnp.float32, -bound, bound)
        self.bert2hidden_b = jax.random.uniform(
            k4, (self.entity_dim,), jnp.float32, -bound, bound)

    def forward(self, sample, pooled_all, mode='single'):
        """pooled_all: (nentity_raw, 768) precomputed BERT pooled outputs."""
        if mode == 'single':
            # relation_type == HAS_STANCE: head from text, tail from entity_embedding
            head_ids = sample[:, 0]
            rel = self.relation_embedding[sample[:, 1]]        # (B, D)
            tail_ids = sample[:, 2:3]                          # (B, 1)
        elif mode == 'tail-batch':
            head_part, tail_part = sample
            head_ids = head_part[:, 0]
            rel = self.relation_embedding[head_part[:, 1]]     # (B, D)
            tail_ids = tail_part                               # (B, N)
        else:
            raise ValueError('mode %s not supported' % mode)

        pooled = pooled_all[head_ids]                          # (B, 768)
        return transe_score(pooled, self.bert2hidden_w, self.bert2hidden_b,
                            rel, self.entity_embedding, tail_ids, self.gamma)

    # pure-JAX reference for correctness checking
    def forward_ref(self, sample, pooled_all, mode='single'):
        if mode == 'single':
            head_ids = sample[:, 0]
            rel = self.relation_embedding[sample[:, 1]][:, None, :]
            tail = self.entity_embedding[sample[:, 2]][:, None, :]
        else:
            head_part, tail_part = sample
            head_ids = head_part[:, 0]
            rel = self.relation_embedding[head_part[:, 1]][:, None, :]
            B, N = tail_part.shape
            tail = self.entity_embedding[tail_part.reshape(-1)].reshape(B, N, -1)
        head = pooled_all[head_ids] @ self.bert2hidden_w + self.bert2hidden_b
        head = head[:, None, :]
        score = head + rel - tail
        return self.gamma - jnp.sum(jnp.abs(score), axis=2)


# -----------------------------------------------------------------------------
if __name__ == "__main__":
    key = jax.random.PRNGKey(0)
    k_model, k_pooled, k_neg = jax.random.split(key, 3)

    nentity_raw = 16     # number of raw (text) entities
    nentity_sym = 6      # number of symbolic entities (stance labels etc.)
    nrelation = 3        # HAS_STANCE / DISAGREE / AGREE
    hidden_dim = 32
    gamma = 12.0
    batch = 2
    neg_size = 8

    model = KGEModelPallas('TransE', nentity_raw, nentity_sym, nrelation,
                           hidden_dim, gamma, k_model)

    # synthetic "BERT pooled output" per raw entity (stands in for bert_model(...)[1])
    pooled_all = jax.random.normal(k_pooled, (nentity_raw, BERT_HIDDEN), jnp.float32)

    # 'single' mode: (head_raw_id, HAS_STANCE, tail_sym_id)
    sample_single = jnp.array([[3, HAS_STANCE, 1],
                               [7, HAS_STANCE, 4]], dtype=jnp.int32)

    # 'tail-batch' mode: positives + negative tail candidates
    head_part = jnp.array([[3, HAS_STANCE, 1],
                           [7, HAS_STANCE, 4]], dtype=jnp.int32)
    tail_part = jax.random.randint(k_neg, (batch, neg_size), 0, nentity_sym,
                                   dtype=jnp.int32)

    score_single = model.forward(sample_single, pooled_all, mode='single')
    score_tail = model.forward((head_part, tail_part), pooled_all, mode='tail-batch')
    jax.block_until_ready((score_single, score_tail))

    ref_single = model.forward_ref(sample_single, pooled_all, mode='single')
    ref_tail = model.forward_ref((head_part, tail_part), pooled_all, mode='tail-batch')

    assert score_single.shape == (batch, 1)
    assert score_tail.shape == (batch, neg_size)
    assert jnp.allclose(score_single, ref_single, atol=1e-3, rtol=1e-3)
    assert jnp.allclose(score_tail, ref_tail, atol=1e-3, rtol=1e-3)

    print("KERNEL_OK")
</pallas_src>

<mosaic_0001>
module attributes {stable_mosaic.version = 11 : i64} {
  func.func @_transe_kernel(%arg0: i32, %arg1: i32, %arg2: memref<1x1xf32, #tpu.memory_space<smem>>, %arg3: memref<8x128xi32, #tpu.memory_space<vmem>>, %arg4: memref<8x768xf32, #tpu.memory_space<vmem>>, %arg5: memref<768x128xf32, #tpu.memory_space<vmem>>, %arg6: memref<8x128xf32, #tpu.memory_space<vmem>>, %arg7: memref<8x128xf32, #tpu.memory_space<vmem>>, %arg8: memref<8x128xf32, #tpu.memory_space<vmem>>, %arg9: memref<8x128xf32, #tpu.memory_space<vmem>>) attributes {dimension_semantics = [#tpu.dimension_semantics<parallel>, #tpu.dimension_semantics<arbitrary>], iteration_bounds = array<i64: 1, 1>, scalar_prefetch = 0 : i64, scratch_operands = 1 : i64, tpu.core_type = #tpu.core_type<tc>, window_params = [{transform_indices = @transform_0, window_bounds = array<i64: 1, 1>}, {transform_indices = @transform_1, window_bounds = array<i64: 8, 128>}, {transform_indices = @transform_2, window_bounds = array<i64: 8, 768>}, {pipeline_mode = #tpu.pipeline_mode<synchronous>, transform_indices = @transform_3, window_bounds = array<i64: 768, 128>}, {transform_indices = @transform_4, window_bounds = array<i64: 8, 128>}, {pipeline_mode = #tpu.pipeline_mode<synchronous>, transform_indices = @transform_5, window_bounds = array<i64: 8, 128>}, {transform_indices = @transform_6, window_bounds = array<i64: 8, 128>}]} {
    %c0_i32 = arith.constant 0 : i32
    %0 = arith.cmpi eq, %arg1, %c0_i32 : i32
    %1 = arith.extui %0 : i1 to i32
    %c0_i32_0 = arith.constant 0 : i32
    %2 = arith.cmpi ne, %1, %c0_i32_0 : i32
    scf.if %2 {
      %c0_21 = arith.constant 0 : index
      %c0_22 = arith.constant 0 : index
      %68 = vector.load %arg4[%c0_21, %c0_22] : memref<8x768xf32, #tpu.memory_space<vmem>>, vector<8x768xf32>
      %c0_23 = arith.constant 0 : index
      %c0_24 = arith.constant 0 : index
      %69 = vector.load %arg5[%c0_23, %c0_24] : memref<768x128xf32, #tpu.memory_space<vmem>>, vector<768x128xf32>
      %cst_25 = arith.constant dense<0.000000e+00> : vector<8x128xf32>
      %70 = tpu.matmul %68, %69, %cst_25 {dimension_numbers = #tpu.dot_dimension_numbers<[1], [0], [0], [1], [0, 0, 1, 1], [], []>} : vector<8x768xf32>, vector<768x128xf32>, vector<8x128xf32> -> vector<8x128xf32>
      %c0_26 = arith.constant 0 : index
      %c0_27 = arith.constant 0 : index
      %71 = vector.load %arg6[%c0_26, %c0_27] : memref<8x128xf32, #tpu.memory_space<vmem>>, vector<8x128xf32>
      %72 = arith.addf %70, %71 : vector<8x128xf32>
      %c0_28 = arith.constant 0 : index
      %c0_29 = arith.constant 0 : index
      %73 = memref.load %arg2[%c0_28, %c0_29] : memref<1x1xf32, #tpu.memory_space<smem>>
      %c0_30 = arith.constant 0 : index
      %c0_31 = arith.constant 0 : index
      %74 = vector.load %arg7[%c0_30, %c0_31] : memref<8x128xf32, #tpu.memory_space<vmem>>, vector<1x128xf32>
      %75 = vector.broadcast %74 : vector<1x128xf32> to vector<8x128xf32>
      %76 = arith.subf %72, %75 : vector<8x128xf32>
      %77 = math.absf %76 : vector<8x128xf32>
      %cst_32 = arith.constant dense<0.000000e+00> : vector<8xf32>
      %78 = vector.multi_reduction <add>, %77, %cst_32 [1] : vector<8x128xf32> to vector<8xf32>
      %79 = vector.shape_cast %78 : vector<8xf32> to vector<8x1xf32>
      %80 = vector.broadcast %73 : f32 to vector<8x1xf32>
      %81 = arith.subf %80, %79 : vector<8x1xf32>
      %c0_33 = arith.constant 0 : index
      %c0_34 = arith.constant 0 : index
      %82 = vector.load %arg9[%c0_33, %c0_34] : memref<8x128xf32, #tpu.memory_space<vmem>>, vector<8x1xf32>
      tpu.vector_store %arg9[%c0_33, %c0_34], %81 {strides = array<i32>} : memref<8x128xf32, #tpu.memory_space<vmem>>, vector<8x1xf32>,
      %c1_35 = arith.constant 1 : index
      %c0_36 = arith.constant 0 : index
      %83 = vector.load %arg7[%c1_35, %c0_36] : memref<8x128xf32, #tpu.memory_space<vmem>>, vector<1x128xf32>
      %84 = vector.broadcast %83 : vector<1x128xf32> to vector<8x128xf32>
      %85 = arith.subf %72, %84 : vector<8x128xf32>
      %86 = math.absf %85 : vector<8x128xf32>
      %cst_37 = arith.constant dense<0.000000e+00> : vector<8xf32>
      %87 = vector.multi_reduction <add>, %86, %cst_37 [1] : vector<8x128xf32> to vector<8xf32>
      %88 = vector.shape_cast %87 : vector<8xf32> to vector<8x1xf32>
      %89 = vector.broadcast %73 : f32 to vector<8x1xf32>
      %90 = arith.subf %89, %88 : vector<8x1xf32>
      %c0_38 = arith.constant 0 : index
      %c1_39 = arith.constant 1 : index
      %91 = vector.load %arg9[%c0_38, %c1_39] : memref<8x128xf32, #tpu.memory_space<vmem>>, vector<8x1xf32>
      tpu.vector_store %arg9[%c0_38, %c1_39], %90 {strides = array<i32>} : memref<8x128xf32, #tpu.memory_space<vmem>>, vector<8x1xf32>,
      %c2_40 = arith.constant 2 : index
      %c0_41 = arith.constant 0 : index
      %92 = vector.load %arg7[%c2_40, %c0_41] : memref<8x128xf32, #tpu.memory_space<vmem>>, vector<1x128xf32>
      %93 = vector.broadcast %92 : vector<1x128xf32> to vector<8x128xf32>
      %94 = arith.subf %72, %93 : vector<8x128xf32>
      %95 = math.absf %94 : vector<8x128xf32>
      %cst_42 = arith.constant dense<0.000000e+00> : vector<8xf32>
      %96 = vector.multi_reduction <add>, %95, %cst_42 [1] : vector<8x128xf32> to vector<8xf32>
      %97 = vector.shape_cast %96 : vector<8xf32> to vector<8x1xf32>
      %98 = vector.broadcast %73 : f32 to vector<8x1xf32>
      %99 = arith.subf %98, %97 : vector<8x1xf32>
      %c0_43 = arith.constant 0 : index
      %c2_44 = arith.constant 2 : index
      %100 = vector.load %arg9[%c0_43, %c2_44] : memref<8x128xf32, #tpu.memory_space<vmem>>, vector<8x1xf32>
      tpu.vector_store %arg9[%c0_43, %c2_44], %99 {strides = array<i32>} : memref<8x128xf32, #tpu.memory_space<vmem>>, vector<8x1xf32>,
      %c3_45 = arith.constant 3 : index
      %c0_46 = arith.constant 0 : index
      %101 = vector.load %arg7[%c3_45, %c0_46] : memref<8x128xf32, #tpu.memory_space<vmem>>, vector<1x128xf32>
      %102 = vector.broadcast %101 : vector<1x128xf32> to vector<8x128xf32>
      %103 = arith.subf %72, %102 : vector<8x128xf32>
      %104 = math.absf %103 : vector<8x128xf32>
      %cst_47 = arith.constant dense<0.000000e+00> : vector<8xf32>
      %105 = vector.multi_reduction <add>, %104, %cst_47 [1] : vector<8x128xf32> to vector<8xf32>
      %106 = vector.shape_cast %105 : vector<8xf32> to vector<8x1xf32>
      %107 = vector.broadcast %73 : f32 to vector<8x1xf32>
      %108 = arith.subf %107, %106 : vector<8x1xf32>
      %c0_48 = arith.constant 0 : index
      %c3_49 = arith.constant 3 : index
      %109 = vector.load %arg9[%c0_48, %c3_49] : memref<8x128xf32, #tpu.memory_space<vmem>>, vector<8x1xf32>
      tpu.vector_store %arg9[%c0_48, %c3_49], %108 {strides = array<i32>} : memref<8x128xf32, #tpu.memory_space<vmem>>, vector<8x1xf32>,
      %c4_50 = arith.constant 4 : index
      %c0_51 = arith.constant 0 : index
      %110 = vector.load %arg7[%c4_50, %c0_51] : memref<8x128xf32, #tpu.memory_space<vmem>>, vector<1x128xf32>
      %111 = vector.broadcast %110 : vector<1x128xf32> to vector<8x128xf32>
      %112 = arith.subf %72, %111 : vector<8x128xf32>
      %113 = math.absf %112 : vector<8x128xf32>
      %cst_52 = arith.constant dense<0.000000e+00> : vector<8xf32>
      %114 = vector.multi_reduction <add>, %113, %cst_52 [1] : vector<8x128xf32> to vector<8xf32>
      %115 = vector.shape_cast %114 : vector<8xf32> to vector<8x1xf32>
      %116 = vector.broadcast %73 : f32 to vector<8x1xf32>
      %117 = arith.subf %116, %115 : vector<8x1xf32>
      %c0_53 = arith.constant 0 : index
      %c4_54 = arith.constant 4 : index
      %118 = vector.load %arg9[%c0_53, %c4_54] : memref<8x128xf32, #tpu.memory_space<vmem>>, vector<8x1xf32>
      tpu.vector_store %arg9[%c0_53, %c4_54], %117 {strides = array<i32>} : memref<8x128xf32, #tpu.memory_space<vmem>>, vector<8x1xf32>,
      %c5_55 = arith.constant 5 : index
      %c0_56 = arith.constant 0 : index
      %119 = vector.load %arg7[%c5_55, %c0_56] : memref<8x128xf32, #tpu.memory_space<vmem>>, vector<1x128xf32>
      %120 = vector.broadcast %119 : vector<1x128xf32> to vector<8x128xf32>
      %121 = arith.subf %72, %120 : vector<8x128xf32>
      %122 = math.absf %121 : vector<8x128xf32>
      %cst_57 = arith.constant dense<0.000000e+00> : vector<8xf32>
      %123 = vector.multi_reduction <add>, %122, %cst_57 [1] : vector<8x128xf32> to vector<8xf32>
      %124 = vector.shape_cast %123 : vector<8xf32> to vector<8x1xf32>
      %125 = vector.broadcast %73 : f32 to vector<8x1xf32>
      %126 = arith.subf %125, %124 : vector<8x1xf32>
      %c0_58 = arith.constant 0 : index
      %c5_59 = arith.constant 5 : index
      %127 = vector.load %arg9[%c0_58, %c5_59] : memref<8x128xf32, #tpu.memory_space<vmem>>, vector<8x1xf32>
      tpu.vector_store %arg9[%c0_58, %c5_59], %126 {strides = array<i32>} : memref<8x128xf32, #tpu.memory_space<vmem>>, vector<8x1xf32>,
      %c6_60 = arith.constant 6 : index
      %c0_61 = arith.constant 0 : index
      %128 = vector.load %arg7[%c6_60, %c0_61] : memref<8x128xf32, #tpu.memory_space<vmem>>, vector<1x128xf32>
      %129 = vector.broadcast %128 : vector<1x128xf32> to vector<8x128xf32>
      %130 = arith.subf %72, %129 : vector<8x128xf32>
      %131 = math.absf %130 : vector<8x128xf32>
      %cst_62 = arith.constant dense<0.000000e+00> : vector<8xf32>
      %132 = vector.multi_reduction <add>, %131, %cst_62 [1] : vector<8x128xf32> to vector<8xf32>
      %133 = vector.shape_cast %132 : vector<8xf32> to vector<8x1xf32>
      %134 = vector.broadcast %73 : f32 to vector<8x1xf32>
      %135 = arith.subf %134, %133 : vector<8x1xf32>
      %c0_63 = arith.constant 0 : index
      %c6_64 = arith.constant 6 : index
      %136 = vector.load %arg9[%c0_63, %c6_64] : memref<8x128xf32, #tpu.memory_space<vmem>>, vector<8x1xf32>
      tpu.vector_store %arg9[%c0_63, %c6_64], %135 {strides = array<i32>} : memref<8x128xf32, #tpu.memory_space<vmem>>, vector<8x1xf32>,
      %c7_65 = arith.constant 7 : index
      %c0_66 = arith.constant 0 : index
      %137 = vector.load %arg7[%c7_65, %c0_66] : memref<8x128xf32, #tpu.memory_space<vmem>>, vector<1x128xf32>
      %138 = vector.broadcast %137 : vector<1x128xf32> to vector<8x128xf32>
      %139 = arith.subf %72, %138 : vector<8x128xf32>
      %140 = math.absf %139 : vector<8x128xf32>
      %cst_67 = arith.constant dense<0.000000e+00> : vector<8xf32>
      %141 = vector.multi_reduction <add>, %140, %cst_67 [1] : vector<8x128xf32> to vector<8xf32>
      %142 = vector.shape_cast %141 : vector<8xf32> to vector<8x1xf32>
      %143 = vector.broadcast %73 : f32 to vector<8x1xf32>
      %144 = arith.subf %143, %142 : vector<8x1xf32>
      %c0_68 = arith.constant 0 : index
      %c7_69 = arith.constant 7 : index
      %145 = vector.load %arg9[%c0_68, %c7_69] : memref<8x128xf32, #tpu.memory_space<vmem>>, vector<8x1xf32>
      tpu.vector_store %arg9[%c0_68, %c7_69], %144 {strides = array<i32>} : memref<8x128xf32, #tpu.memory_space<vmem>>, vector<8x1xf32>,
    } else {
    }
    %c0 = arith.constant 0 : index
    %c0_1 = arith.constant 0 : index
    %3 = vector.load %arg3[%c0, %c0_1] : memref<8x128xi32, #tpu.memory_space<vmem>>, vector<8x128xi32>
    %c0_i32_2 = arith.constant 0 : i32
    %4 = vector.broadcast %c0_i32_2 : i32 to vector<8x128xi32>
    %5 = arith.cmpi eq, %3, %4 : vector<8x128xi32>
    %c0_3 = arith.constant 0 : index
    %c0_4 = arith.constant 0 : index
    %6 = vector.load %arg9[%c0_3, %c0_4] : memref<8x128xf32, #tpu.memory_space<vmem>>, vector<8x1xf32>
    %cst = arith.constant 0.000000e+00 : f32
    %7 = vector.shape_cast %6 : vector<8x1xf32> to vector<8x1xf32>
    %8 = vector.broadcast %7 : vector<8x1xf32> to vector<8x128xf32>
    %9 = vector.broadcast %cst : f32 to vector<8x128xf32>
    %10 = arith.select %5, %8, %9 : vector<8x128xi1>, vector<8x128xf32>
    %c1_i32 = arith.constant 1 : i32
    %11 = vector.broadcast %c1_i32 : i32 to vector<8x128xi32>
    %12 = arith.cmpi eq, %3, %11 : vector<8x128xi32>
    %c0_5 = arith.constant 0 : index
    %c1 = arith.constant 1 : index
    %13 = vector.load %arg9[%c0_5, %c1] : memref<8x128xf32, #tpu.memory_space<vmem>>, vector<8x1xf32>
    %cst_6 = arith.constant 0.000000e+00 : f32
    %14 = vector.shape_cast %13 : vector<8x1xf32> to vector<8x1xf32>
    %15 = vector.broadcast %14 : vector<8x1xf32> to vector<8x128xf32>
    %16 = vector.broadcast %cst_6 : f32 to vector<8x128xf32>
    %17 = arith.select %12, %15, %16 : vector<8x128xi1>, vector<8x128xf32>
    %18 = arith.addf %10, %17 : vector<8x128xf32>
    %c2_i32 = arith.constant 2 : i32
    %19 = vector.broadcast %c2_i32 : i32 to vector<8x128xi32>
    %20 = arith.cmpi eq, %3, %19 : vector<8x128xi32>
    %c0_7 = arith.constant 0 : index
    %c2 = arith.constant 2 : index
    %21 = vector.load %arg9[%c0_7, %c2] : memref<8x128xf32, #tpu.memory_space<vmem>>, vector<8x1xf32>
    %cst_8 = arith.constant 0.000000e+00 : f32
    %22 = vector.shape_cast %21 : vector<8x1xf32> to vector<8x1xf32>
    %23 = vector.broadcast %22 : vector<8x1xf32> to vector<8x128xf32>
    %24 = vector.broadcast %cst_8 : f32 to vector<8x128xf32>
    %25 = arith.select %20, %23, %24 : vector<8x128xi1>, vector<8x128xf32>
    %26 = arith.addf %18, %25 : vector<8x128xf32>
    %c3_i32 = arith.constant 3 : i32
    %27 = vector.broadcast %c3_i32 : i32 to vector<8x128xi32>
    %28 = arith.cmpi eq, %3, %27 : vector<8x128xi32>
    %c0_9 = arith.constant 0 : index
    %c3 = arith.constant 3 : index
    %29 = vector.load %arg9[%c0_9, %c3] : memref<8x128xf32, #tpu.memory_space<vmem>>, vector<8x1xf32>
    %cst_10 = arith.constant 0.000000e+00 : f32
    %30 = vector.shape_cast %29 : vector<8x1xf32> to vector<8x1xf32>
    %31 = vector.broadcast %30 : vector<8x1xf32> to vector<8x128xf32>
    %32 = vector.broadcast %cst_10 : f32 to vector<8x128xf32>
    %33 = arith.select %28, %31, %32 : vector<8x128xi1>, vector<8x128xf32>
    %34 = arith.addf %26, %33 : vector<8x128xf32>
    %c4_i32 = arith.constant 4 : i32
    %35 = vector.broadcast %c4_i32 : i32 to vector<8x128xi32>
    %36 = arith.cmpi eq, %3, %35 : vector<8x128xi32>
    %c0_11 = arith.constant 0 : index
    %c4 = arith.constant 4 : index
    %37 = vector.load %arg9[%c0_11, %c4] : memref<8x128xf32, #tpu.memory_space<vmem>>, vector<8x1xf32>
    %cst_12 = arith.constant 0.000000e+00 : f32
    %38 = vector.shape_cast %37 : vector<8x1xf32> to vector<8x1xf32>
    %39 = vector.broadcast %38 : vector<8x1xf32> to vector<8x128xf32>
    %40 = vector.broadcast %cst_12 : f32 to vector<8x128xf32>
    %41 = arith.select %36, %39, %40 : vector<8x128xi1>, vector<8x128xf32>
    %42 = arith.addf %34, %41 : vector<8x128xf32>
    %c5_i32 = arith.constant 5 : i32
    %43 = vector.broadcast %c5_i32 : i32 to vector<8x128xi32>
    %44 = arith.cmpi eq, %3, %43 : vector<8x128xi32>
    %c0_13 = arith.constant 0 : index
    %c5 = arith.constant 5 : index
    %45 = vector.load %arg9[%c0_13, %c5] : memref<8x128xf32, #tpu.memory_space<vmem>>, vector<8x1xf32>
    %cst_14 = arith.constant 0.000000e+00 : f32
    %46 = vector.shape_cast %45 : vector<8x1xf32> to vector<8x1xf32>
    %47 = vector.broadcast %46 : vector<8x1xf32> to vector<8x128xf32>
    %48 = vector.broadcast %cst_14 : f32 to vector<8x128xf32>
    %49 = arith.select %44, %47, %48 : vector<8x128xi1>, vector<8x128xf32>
    %50 = arith.addf %42, %49 : vector<8x128xf32>
    %c6_i32 = arith.constant 6 : i32
    %51 = vector.broadcast %c6_i32 : i32 to vector<8x128xi32>
    %52 = arith.cmpi eq, %3, %51 : vector<8x128xi32>
    %c0_15 = arith.constant 0 : index
    %c6 = arith.constant 6 : index
    %53 = vector.load %arg9[%c0_15, %c6] : memref<8x128xf32, #tpu.memory_space<vmem>>, vector<8x1xf32>
    %cst_16 = arith.constant 0.000000e+00 : f32
    %54 = vector.shape_cast %53 : vector<8x1xf32> to vector<8x1xf32>
    %55 = vector.broadcast %54 : vector<8x1xf32> to vector<8x128xf32>
    %56 = vector.broadcast %cst_16 : f32 to vector<8x128xf32>
    %57 = arith.select %52, %55, %56 : vector<8x128xi1>, vector<8x128xf32>
    %58 = arith.addf %50, %57 : vector<8x128xf32>
    %c7_i32 = arith.constant 7 : i32
    %59 = vector.broadcast %c7_i32 : i32 to vector<8x128xi32>
    %60 = arith.cmpi eq, %3, %59 : vector<8x128xi32>
    %c0_17 = arith.constant 0 : index
    %c7 = arith.constant 7 : index
    %61 = vector.load %arg9[%c0_17, %c7] : memref<8x128xf32, #tpu.memory_space<vmem>>, vector<8x1xf32>
    %cst_18 = arith.constant 0.000000e+00 : f32
    %62 = vector.shape_cast %61 : vector<8x1xf32> to vector<8x1xf32>
    %63 = vector.broadcast %62 : vector<8x1xf32> to vector<8x128xf32>
    %64 = vector.broadcast %cst_18 : f32 to vector<8x128xf32>
    %65 = arith.select %60, %63, %64 : vector<8x128xi1>, vector<8x128xf32>
    %66 = arith.addf %58, %65 : vector<8x128xf32>
    %c0_19 = arith.constant 0 : index
    %c0_20 = arith.constant 0 : index
    %67 = vector.load %arg8[%c0_19, %c0_20] : memref<8x128xf32, #tpu.memory_space<vmem>>, vector<8x128xf32>
    tpu.vector_store %arg8[%c0_19, %c0_20], %66 {strides = array<i32>} : memref<8x128xf32, #tpu.memory_space<vmem>>, vector<8x128xf32>,
    return
  }
  func.func @transform_0(%arg0: i32, %arg1: i32) -> (i32, i32) {
    %c0_i32 = arith.constant 0 : i32
    %c0_i32_0 = arith.constant 0 : i32
    %c0_i32_1 = arith.constant 0 : i32
    return %c0_i32, %c0_i32_0 : i32, i32
  }
  func.func @transform_1(%arg0: i32, %arg1: i32) -> (i32, i32) {
    %c0_i32 = arith.constant 0 : i32
    return %arg0, %arg1 : i32, i32
  }
  func.func @transform_2(%arg0: i32, %arg1: i32) -> (i32, i32) {
    %c0_i32 = arith.constant 0 : i32
    %c0_i32_0 = arith.constant 0 : i32
    return %arg0, %c0_i32 : i32, i32
  }
  func.func @transform_3(%arg0: i32, %arg1: i32) -> (i32, i32) {
    %c0_i32 = arith.constant 0 : i32
    %c0_i32_0 = arith.constant 0 : i32
    %c0_i32_1 = arith.constant 0 : i32
    return %c0_i32, %c0_i32_0 : i32, i32
  }
  func.func @transform_4(%arg0: i32, %arg1: i32) -> (i32, i32) {
    %c0_i32 = arith.constant 0 : i32
    %c0_i32_0 = arith.constant 0 : i32
    return %arg0, %c0_i32 : i32, i32
  }
  func.func @transform_5(%arg0: i32, %arg1: i32) -> (i32, i32) {
    %c0_i32 = arith.constant 0 : i32
    %c0_i32_0 = arith.constant 0 : i32
    %c0_i32_1 = arith.constant 0 : i32
    return %c0_i32, %c0_i32_0 : i32, i32
  }
  func.func @transform_6(%arg0: i32, %arg1: i32) -> (i32, i32) {
    %c0_i32 = arith.constant 0 : i32
    return %arg0, %arg1 : i32, i32
  }
}

</mosaic_0001>

<llo_original>
// kernel: tpu_custom_call.1
$region0: #{tpu_custom_call.1}
  #allocation0 [shape = 'u32[]', space=smem, size = 0x4, offset = 0x4, fixed_abs, tag = 'smem constant byte address 0x4 - core index']
  #allocation1 [shape = 'u32[144,128]{1,0:T(1,128)}', space=vmem, size = 0x12000, scoped, tag = 'internal scratch']
  #allocation2 [shape = 'f32[8,128]{1,0:T(8,128)}', space=vmem, size = 0x1000, scoped, tag = 'scratch operand']
  #allocation3 [shape = 'f32[1,1]{1,0:T(1,128)S(6)}', space=smem, size = 0x200, scoped, tag = 'scoped memory for tpu_custom_call.1']
  %s0 = inlined_call_operand.<no memory space> [shape: f32[1,1], index: 0, kind: input, shape index: {}]
  %s1 = inlined_call_operand.hbm [shape: s32[8,128], index: 1, kind: input, shape index: {}]
  %s2 = inlined_call_operand.hbm [shape: f32[8,768], index: 2, kind: input, shape index: {}]
  %s3 = inlined_call_operand.hbm [shape: f32[768,128], index: 3, kind: input, shape index: {}]
  %s4 = inlined_call_operand.vmem [shape: f32[8,128], index: 4, kind: input, shape index: {}]
  %s5 = inlined_call_operand.vmem [shape: f32[8,128], index: 5, kind: input, shape index: {}]
  %s6 = inlined_call_operand.hbm [shape: f32[8,128], index: 6, kind: output, shape index: {}]
  %s7 = sld [smem:[#allocation0]]
  $region50: #{tpu_custom_call.1} parent=0
    _
  %s9 = ssub.s32 1, %s7
  %s10 = scalar_select 0, %s9, %s7
  %11 = sst [smem:[#allocation3]] %s0
  $region1: #{tpu_custom_call.1} parent=0
    #allocation4 [shape = 'u8[4096]{0}', space=vmem, size = 0x1000, scoped, tag = 'input window, operand 1, single buffered']
    #allocation5 [shape = 's32[1]{0}', space=sflag, size = 0x4, scoped, tag = 'scoped memory for tpu_custom_call.1']
    #allocation6 [shape = 's32[1]{0}', space=sflag, size = 0x4, scoped, tag = 'scoped memory for tpu_custom_call.1']
    #allocation7 [shape = 'u8[24576]{0}', space=vmem, size = 0x6000, scoped, tag = 'input window, operand 2, single buffered']
    #allocation8 [shape = 's32[1]{0}', space=sflag, size = 0x4, scoped, tag = 'scoped memory for tpu_custom_call.1']
    #allocation9 [shape = 'u8[393216]{0}', space=vmem, size = 0x60000, scoped, tag = 'input window, operand 3, single buffered']
    #allocation10 [shape = 'u8[4096]{0}', space=vmem, size = 0x1000, scoped, tag = 'output window, operand 0, single buffered']
    %12 = vsyncpa [#allocation5], 0
    %13 = vsyncpa [#allocation8], 0
    %14 = vsyncpa [#allocation6], 0
    // Predicated region
    $region2: #{tpu_custom_call.1} parent=1 // pred_check
      _
    $region3: #{tpu_custom_call.1} parent=1 // pred_check_branch
      %16 = sbr.rel (0) target = $region5
    $region4: #{tpu_custom_call.1} parent=1 // pred_region
      _
    $region5: #{tpu_custom_call.1} parent=1 // pred_fallthru
      _
    // Predicated region
    $region6: #{tpu_custom_call.1} parent=1 // pred_check
      _
    $region7: #{tpu_custom_call.1} parent=1 // pred_check_branch
      %18 = sbr.rel (0) target = $region9
    $region8: #{tpu_custom_call.1} parent=1 // pred_region
      %s20 = ssub.s32 128, 128
      %21 = vsyncadd [#allocation5], %s20
      %s23 = sshll.u32 [#allocation4], 4
      %s24 = int_to_ptr.vmem [resolvable:$true] %s23
      %26 = dma.hbm_to_vmem [thread:$0]  %s1, 128, %s24, [#allocation5]
    $region9: #{tpu_custom_call.1} parent=1 // pred_fallthru
      _
    // Predicated region
    $region10: #{tpu_custom_call.1} parent=1 // pred_check
      _
    $region11: #{tpu_custom_call.1} parent=1 // pred_check_branch
      %28 = sbr.rel (0) target = $region13
    $region12: #{tpu_custom_call.1} parent=1 // pred_region
      %s30 = ssub.s32 768, 768
      %31 = vsyncadd [#allocation8], %s30
      %s33 = sshll.u32 [#allocation7], 4
      %s34 = int_to_ptr.vmem [resolvable:$true] %s33
      %36 = dma.hbm_to_vmem [thread:$0]  %s2, 768, %s34, [#allocation8]
    $region13: #{tpu_custom_call.1} parent=1 // pred_fallthru
      _
    // Predicated region
    $region14: #{tpu_custom_call.1} parent=1 // pred_check
      _
    $region15: #{tpu_custom_call.1} parent=1 // pred_check_branch
      %38 = sbr.rel (0) target = $region17
    $region16: #{tpu_custom_call.1} parent=1 // pred_region
      %s40 = ssub.s32 12288, 12288
      %41 = vsyncadd [#allocation8], %s40
      %s42 = sshll.u32 [#allocation9], 4
      %s43 = int_to_ptr.vmem [resolvable:$true] %s42
      %48 = dma.hbm_to_vmem [thread:$0]  %s3, 12288, %s43, [#allocation8], 128, 128, 8
    $region17: #{tpu_custom_call.1} parent=1 // pred_fallthru
      _
    // Predicated region
    $region18: #{tpu_custom_call.1} parent=1 // pred_check
      _
    $region19: #{tpu_custom_call.1} parent=1 // pred_check_branch
      %50 = sbr.rel (0) target = $region21
    $region20: #{tpu_custom_call.1} parent=1 // pred_region
      _
    $region21: #{tpu_custom_call.1} parent=1 // pred_fallthru
      _
    // Predicated region
    $region22: #{tpu_custom_call.1} parent=1 // pred_check
      _
    $region23: #{tpu_custom_call.1} parent=1 // pred_check_branch
      %52 = sbr.rel (0) target = $region25
    $region24: #{tpu_custom_call.1} parent=1 // pred_region
      _
    $region25: #{tpu_custom_call.1} parent=1 // pred_fallthru
      _
    // Predicated region
    $region26: #{tpu_custom_call.1} parent=1 // pred_check
      _
    $region27: #{tpu_custom_call.1} parent=1 // pred_check_branch
      %54 = sbr.rel (0) target = $region29
    $region28: #{tpu_custom_call.1} parent=1 // pred_region
      %55 = dma.done [#allocation5], 128
    $region29: #{tpu_custom_call.1} parent=1 // pred_fallthru
      _
    // Predicated region
    $region30: #{tpu_custom_call.1} parent=1 // pred_check
      _
    $region31: #{tpu_custom_call.1} parent=1 // pred_check_branch
      %57 = sbr.rel (0) target = $region33
    $region32: #{tpu_custom_call.1} parent=1 // pred_region
      %58 = dma.done [#allocation8], 768
    $region33: #{tpu_custom_call.1} parent=1 // pred_fallthru
      _
    // Predicated region
    $region34: #{tpu_custom_call.1} parent=1 // pred_check
      _
    $region35: #{tpu_custom_call.1} parent=1 // pred_check_branch
      %60 = sbr.rel (0) target = $region37
    $region36: #{tpu_custom_call.1} parent=1 // pred_region
      %61 = dma.done [#allocation8], 12288
    $region37: #{tpu_custom_call.1} parent=1 // pred_fallthru
      _
    %p62 = scmp.eq.s32.totalorder 0, 0
    // Predicated region
    $region38: #{tpu_custom_call.1} parent=1 // pred_check
      %p63 = pneg %p62
    $region39: #{tpu_custom_call.1} parent=1 // pred_check_branch
      %65 = sbr.rel (%p63) target = $region41
    $region40: #{tpu_custom_call.1} parent=1 // pred_region
      %v66 = vld [vmem:[#allocation7] sm:$0xff]
      %v67 = vld [vmem:[#allocation7 + $0x8] sm:$0xff]
      %v68 = vld [vmem:[#allocation7 + $0x10] sm:$0xff]
      %v69 = vld [vmem:[#allocation7 + $0x18] sm:$0xff]
      %v70 = vld [vmem:[#allocation7 + $0x20] sm:$0xff]
      %v71 = vld [vmem:[#allocation7 + $0x28] sm:$0xff]
      %v72 = vld [vmem:[#allocation9] sm:$0xff]
      %v73 = vld [vmem:[#allocation9 + $0x8] sm:$0xff]
      %v74 = vld [vmem:[#allocation9 + $0x10] sm:$0xff]
      %v75 = vld [vmem:[#allocation9 + $0x18] sm:$0xff]
      %v76 = vld [vmem:[#allocation9 + $0x20] sm:$0xff]
      %v77 = vld [vmem:[#allocation9 + $0x28] sm:$0xff]
      %v78 = vld [vmem:[#allocation9 + $0x30] sm:$0xff]
      %v79 = vld [vmem:[#allocation9 + $0x38] sm:$0xff]
      %v80 = vld [vmem:[#allocation9 + $0x40] sm:$0xff]
      %v81 = vld [vmem:[#allocation9 + $0x48] sm:$0xff]
      %v82 = vld [vmem:[#allocation9 + $0x50] sm:$0xff]
      %v83 = vld [vmem:[#allocation9 + $0x58] sm:$0xff]
      %v84 = vld [vmem:[#allocation9 + $0x60] sm:$0xff]
      %v85 = vld [vmem:[#allocation9 + $0x68] sm:$0xff]
      %v86 = vld [vmem:[#allocation9 + $0x70] sm:$0xff]
      %v87 = vld [vmem:[#allocation9 + $0x78] sm:$0xff]
      %v88 = vld [vmem:[#allocation9 + $0x80] sm:$0xff]
      %v89 = vld [vmem:[#allocation9 + $0x88] sm:$0xff]
      %v90 = vld [vmem:[#allocation9 + $0x90] sm:$0xff]
      %v91 = vld [vmem:[#allocation9 + $0x98] sm:$0xff]
      %v92 = vld [vmem:[#allocation9 + $0xa0] sm:$0xff]
      %v93 = vld [vmem:[#allocation9 + $0xa8] sm:$0xff]
      %v94 = vld [vmem:[#allocation9 + $0xb0] sm:$0xff]
      %v95 = vld [vmem:[#allocation9 + $0xb8] sm:$0xff]
      %v96 = vld [vmem:[#allocation9 + $0xc0] sm:$0xff]
      %v97 = vld [vmem:[#allocation9 + $0xc8] sm:$0xff]
      %v98 = vld [vmem:[#allocation9 + $0xd0] sm:$0xff]
      %v99 = vld [vmem:[#allocation9 + $0xd8] sm:$0xff]
      %v100 = vld [vmem:[#allocation9 + $0xe0] sm:$0xff]
      %v101 = vld [vmem:[#allocation9 + $0xe8] sm:$0xff]
      %v102 = vld [vmem:[#allocation9 + $0xf0] sm:$0xff]
      %v103 = vld [vmem:[#allocation9 + $0xf8] sm:$0xff]
      %v104 = vld [vmem:[#allocation9 + $0x100] sm:$0xff]
      %v105 = vld [vmem:[#allocation9 + $0x108] sm:$0xff]
      %v106 = vld [vmem:[#allocation9 + $0x110] sm:$0xff]
      %v107 = vld [vmem:[#allocation9 + $0x118] sm:$0xff]
      %v108 = vld [vmem:[#allocation9 + $0x120] sm:$0xff]
      %v109 = vld [vmem:[#allocation9 + $0x128] sm:$0xff]
      %v110 = vld [vmem:[#allocation9 + $0x130] sm:$0xff]
      %v111 = vld [vmem:[#allocation9 + $0x138] sm:$0xff]
      %v112 = vld [vmem:[#allocation9 + $0x140] sm:$0xff]
      %v113 = vld [vmem:[#allocation9 + $0x148] sm:$0xff]
      %v114 = vld [vmem:[#allocation9 + $0x150] sm:$0xff]
      %v115 = vld [vmem:[#allocation9 + $0x158] sm:$0xff]
      %v116 = vld [vmem:[#allocation9 + $0x160] sm:$0xff]
      %v117 = vld [vmem:[#allocation9 + $0x168] sm:$0xff]
      %v118 = vld [vmem:[#allocation9 + $0x170] sm:$0xff]
      %v119 = vld [vmem:[#allocation9 + $0x178] sm:$0xff]
      %v120 = vld [vmem:[#allocation9 + $0x180] sm:$0xff]
      %v121 = vld [vmem:[#allocation9 + $0x188] sm:$0xff]
      %v122 = vld [vmem:[#allocation9 + $0x190] sm:$0xff]
      %v123 = vld [vmem:[#allocation9 + $0x198] sm:$0xff]
      %v124 = vld [vmem:[#allocation9 + $0x1a0] sm:$0xff]
      %v125 = vld [vmem:[#allocation9 + $0x1a8] sm:$0xff]
      %v126 = vld [vmem:[#allocation9 + $0x1b0] sm:$0xff]
      %v127 = vld [vmem:[#allocation9 + $0x1b8] sm:$0xff]
      %v128 = vld [vmem:[#allocation9 + $0x1c0] sm:$0xff]
      %v129 = vld [vmem:[#allocation9 + $0x1c8] sm:$0xff]
      %v130 = vld [vmem:[#allocation9 + $0x1d0] sm:$0xff]
      %v131 = vld [vmem:[#allocation9 + $0x1d8] sm:$0xff]
      %v132 = vld [vmem:[#allocation9 + $0x1e0] sm:$0xff]
      %v133 = vld [vmem:[#allocation9 + $0x1e8] sm:$0xff]
      %v134 = vld [vmem:[#allocation9 + $0x1f0] sm:$0xff]
      %v135 = vld [vmem:[#allocation9 + $0x1f8] sm:$0xff]
      %v136 = vld [vmem:[#allocation9 + $0x200] sm:$0xff]
      %v137 = vld [vmem:[#allocation9 + $0x208] sm:$0xff]
      %v138 = vld [vmem:[#allocation9 + $0x210] sm:$0xff]
      %v139 = vld [vmem:[#allocation9 + $0x218] sm:$0xff]
      %v140 = vld [vmem:[#allocation9 + $0x220] sm:$0xff]
      %v141 = vld [vmem:[#allocation9 + $0x228] sm:$0xff]
      %v142 = vld [vmem:[#allocation9 + $0x230] sm:$0xff]
      %v143 = vld [vmem:[#allocation9 + $0x238] sm:$0xff]
      %v144 = vld [vmem:[#allocation9 + $0x240] sm:$0xff]
      %v145 = vld [vmem:[#allocation9 + $0x248] sm:$0xff]
      %v146 = vld [vmem:[#allocation9 + $0x250] sm:$0xff]
      %v147 = vld [vmem:[#allocation9 + $0x258] sm:$0xff]
      %v148 = vld [vmem:[#allocation9 + $0x260] sm:$0xff]
      %v149 = vld [vmem:[#allocation9 + $0x268] sm:$0xff]
      %v150 = vld [vmem:[#allocation9 + $0x270] sm:$0xff]
      %v151 = vld [vmem:[#allocation9 + $0x278] sm:$0xff]
      %v152 = vld [vmem:[#allocation9 + $0x280] sm:$0xff]
      %v153 = vld [vmem:[#allocation9 + $0x288] sm:$0xff]
      %v154 = vld [vmem:[#allocation9 + $0x290] sm:$0xff]
      %v155 = vld [vmem:[#allocation9 + $0x298] sm:$0xff]
      %v156 = vld [vmem:[#allocation9 + $0x2a0] sm:$0xff]
      %v157 = vld [vmem:[#allocation9 + $0x2a8] sm:$0xff]
      %v158 = vld [vmem:[#allocation9 + $0x2b0] sm:$0xff]
      %v159 = vld [vmem:[#allocation9 + $0x2b8] sm:$0xff]
      %v160 = vld [vmem:[#allocation9 + $0x2c0] sm:$0xff]
      %v161 = vld [vmem:[#allocation9 + $0x2c8] sm:$0xff]
      %v162 = vld [vmem:[#allocation9 + $0x2d0] sm:$0xff]
      %v163 = vld [vmem:[#allocation9 + $0x2d8] sm:$0xff]
      %v164 = vld [vmem:[#allocation9 + $0x2e0] sm:$0xff]
      %v165 = vld [vmem:[#allocation9 + $0x2e8] sm:$0xff]
      %v166 = vld [vmem:[#allocation9 + $0x2f0] sm:$0xff]
      %v167 = vld [vmem:[#allocation9 + $0x2f8] sm:$0xff]
      %v168 = vld [vmem:[%s4] sm:$0xff]
      %169 = vmatprep.subr.mxu0 0.0
      %170 = vmatpush1.msra.mxu0 %v72
      %171 = vmatprep.subr.mxu0 0.0
      %172 = vmatpush1.msra.mxu0 %v73
      %173 = vmatprep.subr.mxu0 0.0
      %174 = vmatpush1.msra.mxu0 %v74
      %175 = vmatprep.subr.mxu0 0.0
      %176 = vmatpush1.msra.mxu0 %v75
      %177 = vmatprep.subr.mxu0 0.0
      %178 = vmatpush1.msra.mxu0 %v76
      %179 = vmatprep.subr.mxu0 0.0
      %180 = vmatpush1.msra.mxu0 %v77
      %181 = vmatprep.subr.mxu0 0.0
      %182 = vmatpush1.msra.mxu0 %v78
      %183 = vmatprep.subr.mxu0 0.0
      %184 = vmatpush1.msra.mxu0 %v79
      %185 = vmatprep.subr.mxu0 0.0
      %186 = vmatpush1.msra.mxu0 %v80
      %187 = vmatprep.subr.mxu0 0.0
      %188 = vmatpush1.msra.mxu0 %v81
      %189 = vmatprep.subr.mxu0 0.0
      %190 = vmatpush1.msra.mxu0 %v82
      %191 = vmatprep.subr.mxu0 0.0
      %192 = vmatpush1.msra.mxu0 %v83
      %193 = vmatprep.subr.mxu0 0.0
      %194 = vmatpush1.msra.mxu0 %v84
      %195 = vmatprep.subr.mxu0 0.0
      %196 = vmatpush1.msra.mxu0 %v85
      %197 = vmatprep.subr.mxu0 0.0
      %198 = vmatpush1.msra.mxu0 %v86
      %199 = vmatprep.subr.mxu0 0.0
      %200 = vmatpush1.msra.mxu0 %v87
      %201 = vmatprep.subr.mxu0 0.0
      %202 = vmatpush1.msra.mxu0 %v88
      %203 = vmatprep.subr.mxu0 0.0
      %204 = vmatpush1.msra.mxu0 %v89
      %205 = vmatprep.subr.mxu0 0.0
      %206 = vmatpush1.msra.mxu0 %v90
      %207 = vmatprep.subr.mxu0 0.0
      %208 = vmatpush1.msra.mxu0 %v91
      %209 = vmatprep.subr.mxu0 0.0
      %210 = vmatpush1.msra.mxu0 %v92
      %211 = vmatprep.subr.mxu0 0.0
      %212 = vmatpush1.msra.mxu0 %v93
      %213 = vmatprep.subr.mxu0 0.0
      %214 = vmatpush1.msra.mxu0 %v94
      %215 = vmatprep.subr.mxu0 0.0
      %216 = vmatpush1.msra.mxu0 %v95
      %217 = vmatprep.subr.mxu0 0.0
      %218 = vmatpush1.msra.mxu0 %v96
      %219 = vmatprep.subr.mxu0 0.0
      %220 = vmatpush1.msra.mxu0 %v97
      %221 = vmatprep.subr.mxu0 0.0
      %222 = vmatpush1.msra.mxu0 %v98
      %223 = vmatprep.subr.mxu0 0.0
      %224 = vmatpush1.msra.mxu0 %v99
      %225 = vmatprep.subr.mxu0 0.0
      %226 = vmatpush1.msra.mxu0 %v100
      %227 = vmatprep.subr.mxu0 0.0
      %228 = vmatpush1.msra.mxu0 %v101
      %229 = vmatprep.subr.mxu0 0.0
      %230 = vmatpush1.msra.mxu0 %v102
      %231 = vmatprep.subr.mxu0 0.0
      %232 = vmatpush1.msra.mxu0 %v103
      %233 = vmatprep.mubr.f32.mxu0 %v67
      %234 = vmatmul.mubr.f32.gmra.mrb[0].mxu0 %v66
      %v235 = vpop.f32.mrb[0].mxu0
      %v236 = vadd.f32 %v168, %v235
      %v237 = vpop.f32.mrb[0].mxu0
      %238 = vdwg.mxu0
      %239 = vmatprep.subr.mxu0 0.0
      %240 = vmatpush1.msra.mxu0 %v104
      %241 = vmatprep.subr.mxu0 0.0
      %242 = vmatpush1.msra.mxu0 %v105
      %243 = vmatprep.subr.mxu0 0.0
      %244 = vmatpush1.msra.mxu0 %v106
      %245 = vmatprep.subr.mxu0 0.0
      %246 = vmatpush1.msra.mxu0 %v107
      %247 = vmatprep.subr.mxu0 0.0
      %248 = vmatpush1.msra.mxu0 %v108
      %249 = vmatprep.subr.mxu0 0.0
      %250 = vmatpush1.msra.mxu0 %v109
      %251 = vmatprep.subr.mxu0 0.0
      %252 = vmatpush1.msra.mxu0 %v110
      %253 = vmatprep.subr.mxu0 0.0
      %254 = vmatpush1.msra.mxu0 %v111
      %255 = vmatprep.subr.mxu0 0.0
      %256 = vmatpush1.msra.mxu0 %v112
      %257 = vmatprep.subr.mxu0 0.0
      %258 = vmatpush1.msra.mxu0 %v113
      %259 = vmatprep.subr.mxu0 0.0
      %260 = vmatpush1.msra.mxu0 %v114
      %261 = vmatprep.subr.mxu0 0.0
      %262 = vmatpush1.msra.mxu0 %v115
      %263 = vmatprep.subr.mxu0 0.0
      %264 = vmatpush1.msra.mxu0 %v116
      %265 = vmatprep.subr.mxu0 0.0
      %266 = vmatpush1.msra.mxu0 %v117
      %267 = vmatprep.subr.mxu0 0.0
      %268 = vmatpush1.msra.mxu0 %v118
      %269 = vmatprep.subr.mxu0 0.0
      %270 = vmatpush1.msra.mxu0 %v119
      %271 = vmatprep.subr.mxu0 0.0
      %272 = vmatpush1.msra.mxu0 %v120
      %273 = vmatprep.subr.mxu0 0.0
      %274 = vmatpush1.msra.mxu0 %v121
      %275 = vmatprep.subr.mxu0 0.0
      %276 = vmatpush1.msra.mxu0 %v122
      %277 = vmatprep.subr.mxu0 0.0
      %278 = vmatpush1.msra.mxu0 %v123
      %279 = vmatprep.subr.mxu0 0.0
      %280 = vmatpush1.msra.mxu0 %v124
      %281 = vmatprep.subr.mxu0 0.0
      %282 = vmatpush1.msra.mxu0 %v125
      %283 = vmatprep.subr.mxu0 0.0
      %284 = vmatpush1.msra.mxu0 %v126
      %285 = vmatprep.subr.mxu0 0.0
      %286 = vmatpush1.msra.mxu0 %v127
      %287 = vmatprep.subr.mxu0 0.0
      %288 = vmatpush1.msra.mxu0 %v128
      %289 = vmatprep.subr.mxu0 0.0
      %290 = vmatpush1.msra.mxu0 %v129
      %291 = vmatprep.subr.mxu0 0.0
      %292 = vmatpush1.msra.mxu0 %v130
      %293 = vmatprep.subr.mxu0 0.0
      %294 = vmatpush1.msra.mxu0 %v131
      %295 = vmatprep.subr.mxu0 0.0
      %296 = vmatpush1.msra.mxu0 %v132
      %297 = vmatprep.subr.mxu0 0.0
      %298 = vmatpush1.msra.mxu0 %v133
      %299 = vmatprep.subr.mxu0 0.0
      %300 = vmatpush1.msra.mxu0 %v134
      %301 = vmatprep.subr.mxu0 0.0
      %302 = vmatpush1.msra.mxu0 %v135
      %303 = vmatprep.mubr.f32.mxu0 %v69
      %304 = vmatmul.mubr.f32.gmra.mrb[0].mxu0 %v68
      %v305 = vpop.f32.mrb[0].mxu0
      %v306 = vadd.f32 %v236, %v305
      %v307 = vpop.f32.mrb[0].mxu0
      %308 = vdwg.mxu0
      %309 = vmatprep.subr.mxu0 0.0
      %310 = vmatpush1.msra.mxu0 %v136
      %311 = vmatprep.subr.mxu0 0.0
      %312 = vmatpush1.msra.mxu0 %v137
      %313 = vmatprep.subr.mxu0 0.0
      %314 = vmatpush1.msra.mxu0 %v138
      %315 = vmatprep.subr.mxu0 0.0
      %316 = vmatpush1.msra.mxu0 %v139
      %317 = vmatprep.subr.mxu0 0.0
      %318 = vmatpush1.msra.mxu0 %v140
      %319 = vmatprep.subr.mxu0 0.0
      %320 = vmatpush1.msra.mxu0 %v141
      %321 = vmatprep.subr.mxu0 0.0
      %322 = vmatpush1.msra.mxu0 %v142
      %323 = vmatprep.subr.mxu0 0.0
      %324 = vmatpush1.msra.mxu0 %v143
      %325 = vmatprep.subr.mxu0 0.0
      %326 = vmatpush1.msra.mxu0 %v144
      %327 = vmatprep.subr.mxu0 0.0
      %328 = vmatpush1.msra.mxu0 %v145
      %329 = vmatprep.subr.mxu0 0.0
      %330 = vmatpush1.msra.mxu0 %v146
      %331 = vmatprep.subr.mxu0 0.0
      %332 = vmatpush1.msra.mxu0 %v147
      %333 = vmatprep.subr.mxu0 0.0
      %334 = vmatpush1.msra.mxu0 %v148
      %335 = vmatprep.subr.mxu0 0.0
      %336 = vmatpush1.msra.mxu0 %v149
      %337 = vmatprep.subr.mxu0 0.0
      %338 = vmatpush1.msra.mxu0 %v150
      %339 = vmatprep.subr.mxu0 0.0
      %340 = vmatpush1.msra.mxu0 %v151
      %341 = vmatprep.subr.mxu0 0.0
      %342 = vmatpush1.msra.mxu0 %v152
      %343 = vmatprep.subr.mxu0 0.0
      %344 = vmatpush1.msra.mxu0 %v153
      %345 = vmatprep.subr.mxu0 0.0
      %346 = vmatpush1.msra.mxu0 %v154
      %347 = vmatprep.subr.mxu0 0.0
      %348 = vmatpush1.msra.mxu0 %v155
      %349 = vmatprep.subr.mxu0 0.0
      %350 = vmatpush1.msra.mxu0 %v156
      %351 = vmatprep.subr.mxu0 0.0
      %352 = vmatpush1.msra.mxu0 %v157
      %353 = vmatprep.subr.mxu0 0.0
      %354 = vmatpush1.msra.mxu0 %v158
      %355 = vmatprep.subr.mxu0 0.0
      %356 = vmatpush1.msra.mxu0 %v159
      %357 = vmatprep.subr.mxu0 0.0
      %358 = vmatpush1.msra.mxu0 %v160
      %359 = vmatprep.subr.mxu0 0.0
      %360 = vmatpush1.msra.mxu0 %v161
      %361 = vmatprep.subr.mxu0 0.0
      %362 = vmatpush1.msra.mxu0 %v162
      %363 = vmatprep.subr.mxu0 0.0
      %364 = vmatpush1.msra.mxu0 %v163
      %365 = vmatprep.subr.mxu0 0.0
      %366 = vmatpush1.msra.mxu0 %v164
      %367 = vmatprep.subr.mxu0 0.0
      %368 = vmatpush1.msra.mxu0 %v165
      %369 = vmatprep.subr.mxu0 0.0
      %370 = vmatpush1.msra.mxu0 %v166
      %371 = vmatprep.subr.mxu0 0.0
      %372 = vmatpush1.msra.mxu0 %v167
      %373 = vmatprep.mubr.f32.mxu0 %v71
      %374 = vmatmul.mubr.f32.gmra.mrb[0].mxu0 %v70
      %v375 = vpop.f32.mrb[0].mxu0
      %v376 = vadd.f32 %v306, %v375
      %v377 = vpop.f32.mrb[0].mxu0
      %378 = vdwg.mxu0
      %s379 = sld [smem:[#allocation3]]
      %v380 = vld [vmem:[%s5] sm:$0x1]
      %v381 = vlaneseq
      %v382 = vshrl.u32 %v381, 7
      %v383 = vsub.s32 0, %v382
      %v384 = vrot.slane %v380, %v383
      %v385 = vsub.f32 %v376, %v384
      %v386 = vand.u32 2147483647, %v385
      %387 = vadd.xlane.f32.xlu0 %v386
      %v388 = vpop.xlane.xlu0 %387
      %v389 = vstv %s379
      %v390 = vsub.f32 %v389, %v388
      %vm391 = vcmask 7168
      %392 = vst.msk [vmem:[#allocation2] sm:$0xff] %vm391, %v390
      %v393 = vld [vmem:[%s5 + $0x1] sm:$0x1]
      %v394 = vlaneseq
      %v395 = vshrl.u32 %v394, 7
      %v396 = vsub.s32 0, %v395
      %v397 = vrot.slane %v393, %v396
      %v398 = vsub.f32 %v376, %v397
      %v399 = vand.u32 2147483647, %v398
      %400 = vadd.xlane.f32.xlu0 %v399
      %v401 = vpop.xlane.xlu0 %400
      %v402 = vsub.f32 %v389, %v401
      %vm403 = vcmask 15368
      %404 = vst.msk [vmem:[#allocation2] sm:$0xff] %vm403, %v402
      %v405 = vld [vmem:[%s5 + $0x2] sm:$0x1]
      %v406 = vlaneseq
      %v407 = vshrl.u32 %v406, 7
      %v408 = vsub.s32 0, %v407
      %v409 = vrot.slane %v405, %v408
      %v410 = vsub.f32 %v376, %v409
      %v411 = vand.u32 2147483647, %v410
      %412 = vadd.xlane.f32.xlu0 %v411
      %v413 = vpop.xlane.xlu0 %412
      %v414 = vsub.f32 %v389, %v413
      %vm415 = vcmask 23568
      %416 = vst.msk [vmem:[#allocation2] sm:$0xff] %vm415, %v414
      %v417 = vld [vmem:[%s5 + $0x3] sm:$0x1]
      %v418 = vlaneseq
      %v419 = vshrl.u32 %v418, 7
      %v420 = vsub.s32 0, %v419
      %v421 = vrot.slane %v417, %v420
      %v422 = vsub.f32 %v376, %v421
      %v423 = vand.u32 2147483647, %v422
      %424 = vadd.xlane.f32.xlu0 %v423
      %v425 = vpop.xlane.xlu0 %424
      %v426 = vsub.f32 %v389, %v425
      %vm427 = vcmask 31768
      %428 = vst.msk [vmem:[#allocation2] sm:$0xff] %vm427, %v426
      %v429 = vld [vmem:[%s5 + $0x4] sm:$0x1]
      %v430 = vlaneseq
      %v431 = vshrl.u32 %v430, 7
      %v432 = vsub.s32 0, %v431
      %v433 = vrot.slane %v429, %v432
      %v434 = vsub.f32 %v376, %v433
      %v435 = vand.u32 2147483647, %v434
      %436 = vadd.xlane.f32.xlu0 %v435
      %v437 = vpop.xlane.xlu0 %436
      %v438 = vsub.f32 %v389, %v437
      %vm439 = vcmask 39968
      %440 = vst.msk [vmem:[#allocation2] sm:$0xff] %vm439, %v438
      %v441 = vld [vmem:[%s5 + $0x5] sm:$0x1]
      %v442 = vlaneseq
      %v443 = vshrl.u32 %v442, 7
      %v444 = vsub.s32 0, %v443
      %v445 = vrot.slane %v441, %v444
      %v446 = vsub.f32 %v376, %v445
      %v447 = vand.u32 2147483647, %v446
      %448 = vadd.xlane.f32.xlu0 %v447
      %v449 = vpop.xlane.xlu0 %448
      %v450 = vsub.f32 %v389, %v449
      %vm451 = vcmask 48168
      %452 = vst.msk [vmem:[#allocation2] sm:$0xff] %vm451, %v450
      %v453 = vld [vmem:[%s5 + $0x6] sm:$0x1]
      %v454 = vlaneseq
      %v455 = vshrl.u32 %v454, 7
      %v456 = vsub.s32 0, %v455
      %v457 = vrot.slane %v453, %v456
      %v458 = vsub.f32 %v376, %v457
      %v459 = vand.u32 2147483647, %v458
      %460 = vadd.xlane.f32.xlu0 %v459
      %v461 = vpop.xlane.xlu0 %460
      %v462 = vsub.f32 %v389, %v461
      %vm463 = vcmask 56368
      %464 = vst.msk [vmem:[#allocation2] sm:$0xff] %vm463, %v462
      %v465 = vld [vmem:[%s5 + $0x7] sm:$0x1]
      %v466 = vlaneseq
      %v467 = vshrl.u32 %v466, 7
      %v468 = vsub.s32 0, %v467
      %v469 = vrot.slane %v465, %v468
      %v470 = vsub.f32 %v376, %v469
      %v471 = vand.u32 2147483647, %v470
      %472 = vadd.xlane.f32.xlu0 %v471
      %v473 = vpop.xlane.xlu0 %472
      %v474 = vsub.f32 %v389, %v473
      %vm475 = vcmask 64568
      %476 = vst.msk [vmem:[#allocation2] sm:$0xff] %vm475, %v474
    $region41: #{tpu_custom_call.1} parent=1 // pred_fallthru
      _
    %v477 = vld [vmem:[#allocation4] sm:$0xff]
    %vm478 = vcmp.eq.s32.totalorder %v477, 0
    %v479 = vld [vmem:[#allocation2] sm:$0xff]
    %481 = vset.pattern.permute.xlu0 0
    %482 = vperm.xlu0 %481, %v479
    %v483 = vpop.permute.xlu0 %482
    %v485 = vsel %vm478, %v483, 0.0
    %vm486 = vcmp.eq.s32.totalorder %v477, 1
    %487 = vset.pattern.permute.xlu0 1
    %488 = vperm.xlu0 %487, %v479
    %v489 = vpop.permute.xlu0 %488
    %v491 = vsel %vm486, %v489, 0.0
    %v492 = vadd.f32 %v485, %v491
    %vm493 = vcmp.eq.s32.totalorder %v477, 2
    %494 = vset.pattern.permute.xlu0 2
    %495 = vperm.xlu0 %494, %v479
    %v496 = vpop.permute.xlu0 %495
    %v498 = vsel %vm493, %v496, 0.0
    %v499 = vadd.f32 %v492, %v498
    %vm500 = vcmp.eq.s32.totalorder %v477, 3
    %501 = vset.pattern.permute.xlu0 3
    %502 = vperm.xlu0 %501, %v479
    %v503 = vpop.permute.xlu0 %502
    %v505 = vsel %vm500, %v503, 0.0
    %v506 = vadd.f32 %v499, %v505
    %vm507 = vcmp.eq.s32.totalorder %v477, 4
    %508 = vset.pattern.permute.xlu0 4
    %509 = vperm.xlu0 %508, %v479
    %v510 = vpop.permute.xlu0 %509
    %v512 = vsel %vm507, %v510, 0.0
    %v513 = vadd.f32 %v506, %v512
    %vm514 = vcmp.eq.s32.totalorder %v477, 5
    %515 = vset.pattern.permute.xlu0 5
    %516 = vperm.xlu0 %515, %v479
    %v517 = vpop.permute.xlu0 %516
    %v519 = vsel %vm514, %v517, 0.0
    %v520 = vadd.f32 %v513, %v519
    %vm521 = vcmp.eq.s32.totalorder %v477, 6
    %522 = vset.pattern.permute.xlu0 6
    %523 = vperm.xlu0 %522, %v479
    %v524 = vpop.permute.xlu0 %523
    %v526 = vsel %vm521, %v524, 0.0
    %v527 = vadd.f32 %v520, %v526
    %vm528 = vcmp.eq.s32.totalorder %v477, 7
    %529 = vset.pattern.permute.xlu0 7
    %530 = vperm.xlu0 %529, %v479
    %v531 = vpop.permute.xlu0 %530
    %v533 = vsel %vm528, %v531, 0.0
    %v534 = vadd.f32 %v527, %v533
    %535 = vst [vmem:[#allocation10] sm:$0xff] %v534
    // Predicated region
    $region42: #{tpu_custom_call.1} parent=1 // pred_check
      _
    $region43: #{tpu_custom_call.1} parent=1 // pred_check_branch
      %537 = sbr.rel (0) target = $region45
    $region44: #{tpu_custom_call.1} parent=1 // pred_region
      %s539 = ssub.s32 128, 128
      %540 = vsyncadd [#allocation6], %s539
      %s542 = sshll.u32 [#allocation10], 4
      %s543 = int_to_ptr.vmem [resolvable:$true] %s542
      %545 = dma.vmem_to_hbm [thread:$0]  %s543, 128, %s6, [#allocation6]
    $region45: #{tpu_custom_call.1} parent=1 // pred_fallthru
      _
    // Predicated region
    $region46: #{tpu_custom_call.1} parent=1 // pred_check
      _
    $region47: #{tpu_custom_call.1} parent=1 // pred_check_branch
      %547 = sbr.rel (0) target = $region49
    $region48: #{tpu_custom_call.1} parent=1 // pred_region
      %548 = dma.done [#allocation6], 128
    $region49: #{tpu_custom_call.1} parent=1 // pred_fallthru
      _
    %549 = vsyncpa [#allocation5], 1
    %550 = vsyncpa [#allocation8], 1
    %551 = vsyncpa [#allocation6], 1

</llo_original>
